<compile_context>
chip_gen: v6e
topology: v6e:2x2x1
jax: 0.10.0
libtpu: 0.0.40
codegen_flags: <defaults>
</compile_context>

<pallas_src>
import jax
import jax.numpy as jnp
from jax.experimental import pallas as pl
from jax.experimental.pallas import tpu as pltpu


# ---------------- configuration (small, consistent with module) --------------
B = 2                 # demo batch (wrapper handles any B; larger B amortizes DMA)
C_IN = 256            # conv1 in-channels (fixed by module)
C_MID = 128           # conv1 out-channels (fixed by module)
H = W = 2             # spatial; 2x2 kernel -> 1x1 output, so .squeeze() -> [B, c]
NUM_DIS_C = 2
DIS_C_DIM = 5
NUM_CON_C = 4
DC = max(1, NUM_DIS_C * DIS_C_DIM)   # 10
CC = max(1, NUM_CON_C)               # 4
K_FLAT = C_IN * H * W                # 1024
HEAD_PAD = 128                       # lane-dense fused head width (DC+2*CC=18 used)
BN_EPS = 1e-5
LRELU_SLOPE = 0.1


# ------------------------------- Pallas kernel -------------------------------
def qhead_kernel(x_ref, w1_ref, wh_ref, aff_ref, out_ref):
    # x_ref:   [B, 1024]   f32   flattened NCHW receptive field
    # w1_ref:  [1024, 128] bf16  conv1 weight, pre-flattened + pre-transposed
    # wh_ref:  [128, 128]  bf16  fused head weight (cols: disc | mu | var | zeros)
    # aff_ref: [4, 128]    f32   row0=gamma, row1=beta, row2=fused head bias,
    #                            row3=var-column 0/1 mask
    # out_ref: [B, 128]    f32   lane-dense fused head output

    # cast to bf16 inside the kernel (no standalone convert op in the wrapper)
    x = x_ref[...].astype(jnp.bfloat16)

    # conv1 (2x2 conv at 1x1 output == full matmul); bf16 operands, f32 accumulate
    h = jnp.dot(x, w1_ref[...], preferred_element_type=jnp.float32)

    # BatchNorm2d(128), training-mode batch stats over the full batch (H*W==1)
    mean = jnp.mean(h, axis=0, keepdims=True)                    # [1, 128]
    c = h - mean
    var = jnp.mean(c * c, axis=0, keepdims=True)                 # biased variance
    h = c * jax.lax.rsqrt(var + BN_EPS) * aff_ref[0:1, :] + aff_ref[1:2, :]

    # leaky_relu(., 0.1)
    h = jnp.maximum(h, LRELU_SLOPE * h)

    # fused 1x1-conv heads: ONE lane-dense bf16 MXU matmul + f32 bias row
    y = jnp.dot(h.astype(jnp.bfloat16), wh_ref[...],
                preferred_element_type=jnp.float32) + aff_ref[2:3, :]

    # exp() applies only to the var columns; mask precomputed on host.
    # exp(y * mask) == exp(0) == 1 on non-var columns, so no overflow there.
    vmask = aff_ref[3:4, :]
    e = jnp.exp(y * vmask)
    out_ref[...] = jnp.where(vmask > 0.0, e, y)


# ---------------------- one-time parameter preparation ------------------------
def prepare_params(params):
    """Reshape / transpose / fuse the PyTorch-layout params ONCE (outside the
    per-call path)."""
    w1, gamma, beta, wd, bd, wm, bm, wv, bv = params

    # conv1 weight: [128, 256, 2, 2] -> [1024, 128], bf16 for the MXU feed
    w1_t = w1.reshape(C_MID, K_FLAT).T.astype(jnp.bfloat16)

    # fused head weight [128, HEAD_PAD] in bf16: disc | mu | var | zero padding
    wh = jnp.zeros((C_MID, HEAD_PAD), jnp.float32)
    wh = wh.at[:, 0:DC].set(wd.reshape(DC, C_MID).T)
    wh = wh.at[:, DC:DC + CC].set(wm.reshape(CC, C_MID).T)
    wh = wh.at[:, DC + CC:DC + 2 * CC].set(wv.reshape(CC, C_MID).T)
    wh = wh.astype(jnp.bfloat16)

    # fused head bias [HEAD_PAD]
    bh = jnp.zeros((HEAD_PAD,), jnp.float32)
    bh = bh.at[0:DC].set(bd)
    bh = bh.at[DC:DC + CC].set(bm)
    bh = bh.at[DC + CC:DC + 2 * CC].set(bv)

    # var-column mask [HEAD_PAD]: 1.0 on [DC+CC, DC+2*CC), else 0.0
    vmask = jnp.zeros((HEAD_PAD,), jnp.float32)
    vmask = vmask.at[DC + CC:DC + 2 * CC].set(1.0)

    # pack gamma / beta / head-bias / var-mask into a single [4, 128] array
    aff = jnp.stack([gamma, beta, bh, vmask], axis=0).astype(jnp.float32)
    return (w1_t, wh, aff)


# ------------------------------- host wrapper ---------------------------------
@jax.jit
def qhead_forward(x_nchw, prepped):
    """x_nchw: [B, 256, 2, 2] f32. Returns (disc [B,DC], mu [B,CC], var [B,CC])."""
    w1_t, wh, aff = prepped
    b = x_nchw.shape[0]
    # contiguous NCHW reshape is layout-free; the bf16 cast happens in-kernel
    x_flat = x_nchw.reshape(b, K_FLAT)

    vmem = lambda: pl.BlockSpec(memory_space=pltpu.MemorySpace.VMEM)
    y = pl.pallas_call(
        qhead_kernel,
        out_shape=jax.ShapeDtypeStruct((b, HEAD_PAD), jnp.float32),
        in_specs=[vmem(), vmem(), vmem(), vmem()],
        out_specs=vmem(),
    )(x_flat, w1_t, wh, aff)

    disc = y[:, 0:DC]
    mu = y[:, DC:DC + CC]
    var = y[:, DC + CC:DC + 2 * CC]
    return disc, mu, var


# ------------------------ deterministic parameter init ------------------------
def init_params(key):
    ks = jax.random.split(key, 8)
    w1 = 0.02 * jax.random.normal(ks[0], (C_MID, C_IN, H, W), jnp.float32)
    gamma = 1.0 + 0.01 * jax.random.normal(ks[1], (C_MID,), jnp.float32)
    beta = 0.01 * jax.random.normal(ks[2], (C_MID,), jnp.float32)
    wd = 0.05 * jax.random.normal(ks[3], (DC, C_MID, 1, 1), jnp.float32)
    bd = 0.01 * jax.random.normal(ks[4], (DC,), jnp.float32)
    wm = 0.05 * jax.random.normal(ks[5], (CC, C_MID, 1, 1), jnp.float32)
    bm = 0.01 * jax.random.normal(ks[6], (CC,), jnp.float32)
    wv = 0.05 * jax.random.normal(ks[7], (CC, C_MID, 1, 1), jnp.float32)
    bv = jnp.zeros((CC,), jnp.float32)
    return (w1, gamma, beta, wd, bd, wm, bm, wv, bv)


# ------------------------------ pure-JAX reference -----------------------------
def qhead_ref(x_nchw, params, mxu_bf16=False):
    """Reference. mxu_bf16=True mirrors the kernel's bf16-operand MXU matmuls."""
    w1, gamma, beta, wd, bd, wm, bm, wv, bv = params
    b = x_nchw.shape[0]
    xf = x_nchw.reshape(b, K_FLAT)
    w1t = w1.reshape(C_MID, K_FLAT).T
    wd_t = wd.reshape(DC, C_MID).T
    wm_t = wm.reshape(CC, C_MID).T
    wv_t = wv.reshape(CC, C_MID).T

    if mxu_bf16:
        h = jnp.dot(xf.astype(jnp.bfloat16), w1t.astype(jnp.bfloat16),
                    preferred_element_type=jnp.float32)
    else:
        h = xf @ w1t
    mean = jnp.mean(h, axis=0, keepdims=True)
    var = jnp.mean((h - mean) ** 2, axis=0, keepdims=True)
    h = (h - mean) / jnp.sqrt(var + BN_EPS) * gamma[None, :] + beta[None, :]
    h = jnp.where(h >= 0, h, LRELU_SLOPE * h)

    if mxu_bf16:
        hb = h.astype(jnp.bfloat16)
        disc = jnp.dot(hb, wd_t.astype(jnp.bfloat16),
                       preferred_element_type=jnp.float32) + bd[None, :]
        mu = jnp.dot(hb, wm_t.astype(jnp.bfloat16),
                     preferred_element_type=jnp.float32) + bm[None, :]
        v = jnp.exp(jnp.dot(hb, wv_t.astype(jnp.bfloat16),
                            preferred_element_type=jnp.float32) + bv[None, :])
    else:
        disc = h @ wd_t + bd[None, :]
        mu = h @ wm_t + bm[None, :]
        v = jnp.exp(h @ wv_t + bv[None, :])
    return disc, mu, v


def _check(x, params, prepped, tight_tol, loose_tol):
    disc, mu, var = jax.block_until_ready(qhead_forward(x, prepped))
    b = x.shape[0]
    assert disc.shape == (b, DC) and mu.shape == (b, CC) and var.shape == (b, CC)

    # tight check vs a reference mirroring the bf16 MXU operand path
    d1, m1, v1 = qhead_ref(x, params, mxu_bf16=True)
    assert jnp.allclose(disc, d1, atol=tight_tol, rtol=tight_tol)
    assert jnp.allclose(mu, m1, atol=tight_tol, rtol=tight_tol)
    assert jnp.allclose(var, v1, atol=tight_tol, rtol=tight_tol)

    # looser check vs pure-f32 module semantics (covers bf16 weight quantization)
    d2, m2, v2 = qhead_ref(x, params, mxu_bf16=False)
    assert jnp.allclose(disc, d2, atol=loose_tol, rtol=loose_tol)
    assert jnp.allclose(mu, m2, atol=loose_tol, rtol=loose_tol)
    assert jnp.allclose(var, v2, atol=loose_tol, rtol=loose_tol)


if __name__ == "__main__":
    key = jax.random.PRNGKey(0)
    kx, kp, kx2 = jax.random.split(key, 3)
    params = init_params(kp)
    prepped = prepare_params(params)

    # module-sized demo batch
    x = jax.random.normal(kx, (B, C_IN, H, W), jnp.float32)
    _check(x, params, prepped, tight_tol=2e-3, loose_tol=5e-2)

    # same kernel with a bigger batch in one call (the DMA/launch-amortizing path);
    # BN batch statistics are still computed over the whole batch inside the kernel.
    x_big = jax.random.normal(kx2, (16, C_IN, H, W), jnp.float32)
    _check(x_big, params, prepped, tight_tol=2e-3, loose_tol=5e-2)

    print("KERNEL_OK")
</pallas_src>

<mosaic_0001>
module attributes {stable_mosaic.version = 11 : i64} {
  func.func @qhead_kernel(%arg0: memref<2x1024xf32, #tpu.memory_space<vmem>>, %arg1: memref<1024x128xbf16, #tpu.memory_space<vmem>>, %arg2: memref<128x128xbf16, #tpu.memory_space<vmem>>, %arg3: memref<4x128xf32, #tpu.memory_space<vmem>>, %arg4: memref<2x128xf32, #tpu.memory_space<vmem>>) attributes {dimension_semantics = [], scalar_prefetch = 0 : i64, scratch_operands = 0 : i64, tpu.core_type = #tpu.core_type<tc>} {
    %c0 = arith.constant 0 : index
    %c0_0 = arith.constant 0 : index
    %0 = vector.load %arg0[%c0, %c0_0] : memref<2x1024xf32, #tpu.memory_space<vmem>>, vector<2x1024xf32>
    %1 = arith.truncf %0 : vector<2x1024xf32> to vector<2x1024xbf16>
    %c0_1 = arith.constant 0 : index
    %c0_2 = arith.constant 0 : index
    %2 = vector.load %arg1[%c0_1, %c0_2] : memref<1024x128xbf16, #tpu.memory_space<vmem>>, vector<1024x128xbf16>
    %cst = arith.constant dense<0.000000e+00> : vector<2x128xf32>
    %3 = tpu.matmul %1, %2, %cst {dimension_numbers = #tpu.dot_dimension_numbers<[1], [0], [0], [1], [0, 0, 1, 1], [], []>} : vector<2x1024xbf16>, vector<1024x128xbf16>, vector<2x128xf32> -> vector<2x128xf32>
    %cst_3 = arith.constant dense<0.000000e+00> : vector<128xf32>
    %4 = vector.multi_reduction <add>, %3, %cst_3 [0] : vector<2x128xf32> to vector<128xf32>
    %5 = vector.shape_cast %4 : vector<128xf32> to vector<1x128xf32>
    %cst_4 = arith.constant 2.000000e+00 : f32
    %6 = vector.broadcast %cst_4 : f32 to vector<1x128xf32>
    %7 = arith.divf %5, %6 : vector<1x128xf32>
    %8 = vector.broadcast %7 : vector<1x128xf32> to vector<2x128xf32>
    %9 = arith.subf %3, %8 : vector<2x128xf32>
    %10 = arith.mulf %9, %9 : vector<2x128xf32>
    %cst_5 = arith.constant dense<0.000000e+00> : vector<128xf32>
    %11 = vector.multi_reduction <add>, %10, %cst_5 [0] : vector<2x128xf32> to vector<128xf32>
    %12 = vector.shape_cast %11 : vector<128xf32> to vector<1x128xf32>
    %cst_6 = arith.constant 2.000000e+00 : f32
    %13 = vector.broadcast %cst_6 : f32 to vector<1x128xf32>
    %14 = arith.divf %12, %13 : vector<1x128xf32>
    %cst_7 = arith.constant 9.99999974E-6 : f32
    %15 = vector.broadcast %cst_7 : f32 to vector<1x128xf32>
    %16 = arith.addf %14, %15 : vector<1x128xf32>
    %17 = math.rsqrt %16 : vector<1x128xf32>
    %18 = vector.broadcast %17 : vector<1x128xf32> to vector<2x128xf32>
    %19 = arith.mulf %9, %18 : vector<2x128xf32>
    %c0_8 = arith.constant 0 : index
    %c0_9 = arith.constant 0 : index
    %20 = vector.load %arg3[%c0_8, %c0_9] : memref<4x128xf32, #tpu.memory_space<vmem>>, vector<1x128xf32>
    %21 = vector.broadcast %20 : vector<1x128xf32> to vector<2x128xf32>
    %22 = arith.mulf %19, %21 : vector<2x128xf32>
    %c1 = arith.constant 1 : index
    %c0_10 = arith.constant 0 : index
    %23 = vector.load %arg3[%c1, %c0_10] : memref<4x128xf32, #tpu.memory_space<vmem>>, vector<1x128xf32>
    %24 = vector.broadcast %23 : vector<1x128xf32> to vector<2x128xf32>
    %25 = arith.addf %22, %24 : vector<2x128xf32>
    %cst_11 = arith.constant 1.000000e-01 : f32
    %26 = vector.broadcast %cst_11 : f32 to vector<2x128xf32>
    %27 = arith.mulf %26, %25 : vector<2x128xf32>
    %28 = arith.maximumf %25, %27 : vector<2x128xf32>
    %29 = arith.truncf %28 : vector<2x128xf32> to vector<2x128xbf16>
    %c0_12 = arith.constant 0 : index
    %c0_13 = arith.constant 0 : index
    %30 = vector.load %arg2[%c0_12, %c0_13] : memref<128x128xbf16, #tpu.memory_space<vmem>>, vector<128x128xbf16>
    %cst_14 = arith.constant dense<0.000000e+00> : vector<2x128xf32>
    %31 = tpu.matmul %29, %30, %cst_14 {dimension_numbers = #tpu.dot_dimension_numbers<[1], [0], [0], [1], [0, 0, 1, 1], [], []>} : vector<2x128xbf16>, vector<128x128xbf16>, vector<2x128xf32> -> vector<2x128xf32>
    %c2 = arith.constant 2 : index
    %c0_15 = arith.constant 0 : index
    %32 = vector.load %arg3[%c2, %c0_15] : memref<4x128xf32, #tpu.memory_space<vmem>>, vector<1x128xf32>
    %33 = vector.broadcast %32 : vector<1x128xf32> to vector<2x128xf32>
    %34 = arith.addf %31, %33 : vector<2x128xf32>
    %c3 = arith.constant 3 : index
    %c0_16 = arith.constant 0 : index
    %35 = vector.load %arg3[%c3, %c0_16] : memref<4x128xf32, #tpu.memory_space<vmem>>, vector<1x128xf32>
    %36 = vector.broadcast %35 : vector<1x128xf32> to vector<2x128xf32>
    %37 = arith.mulf %34, %36 : vector<2x128xf32>
    %38 = math.exp %37 : vector<2x128xf32>
    %cst_17 = arith.constant 0.000000e+00 : f32
    %39 = vector.broadcast %cst_17 : f32 to vector<1x128xf32>
    %40 = arith.cmpf ogt, %35, %39 : vector<1x128xf32>
    %41 = vector.shape_cast %40 : vector<1x128xi1> to vector<1x128xi1>
    %42 = vector.broadcast %41 : vector<1x128xi1> to vector<2x128xi1>
    %43 = arith.select %42, %38, %34 : vector<2x128xi1>, vector<2x128xf32>
    %c0_18 = arith.constant 0 : index
    %c0_19 = arith.constant 0 : index
    %44 = vector.load %arg4[%c0_18, %c0_19] : memref<2x128xf32, #tpu.memory_space<vmem>>, vector<2x128xf32>
    tpu.vector_store %arg4[%c0_18, %c0_19], %43 {strides = array<i32>} : memref<2x128xf32, #tpu.memory_space<vmem>>, vector<2x128xf32>,
    return
  }
}

</mosaic_0001>

<llo_original>
// kernel: qhead_forward.1
$region0: #{qhead_forward.1}
  #allocation0 [shape = 'u32[]', space=smem, size = 0x4, offset = 0x4, fixed_abs, tag = 'smem constant byte address 0x4 - core index']
  #allocation1 [shape = 'u32[144,128]{1,0:T(1,128)}', space=vmem, size = 0x12000, scoped, tag = 'internal scratch']
  %s0 = inlined_call_operand.vmem [shape: f32[2,1024], index: 0, kind: input, shape index: {}]
  %s1 = inlined_call_operand.vmem [shape: bf16[1024,128], index: 1, kind: input, shape index: {}]
  %s2 = inlined_call_operand.vmem [shape: bf16[128,128], index: 2, kind: input, shape index: {}]
  %s3 = inlined_call_operand.vmem [shape: f32[4,128], index: 3, kind: input, shape index: {}]
  %s4 = inlined_call_operand.vmem [shape: f32[2,128], index: 4, kind: output, shape index: {}]
  %s5 = sld [smem:[#allocation0]]
  $region26: #{qhead_forward.1} parent=0
    _
  %s7 = ssub.s32 1, %s5
  %s8 = scalar_select 0, %s7, %s5
  // Predicated region
  $region2: #{qhead_forward.1} parent=0 // pred_check
    _
  $region3: #{qhead_forward.1} parent=0 // pred_check_branch
    %10 = sbr.rel (0) target = $region5
  $region4: #{qhead_forward.1} parent=0 // pred_region
    _
  $region5: #{qhead_forward.1} parent=0 // pred_fallthru
    _
  // Predicated region
  $region6: #{qhead_forward.1} parent=0 // pred_check
    _
  $region7: #{qhead_forward.1} parent=0 // pred_check_branch
    %12 = sbr.rel (0) target = $region9
  $region8: #{qhead_forward.1} parent=0 // pred_region
    _
  $region9: #{qhead_forward.1} parent=0 // pred_fallthru
    _
  // Predicated region
  $region10: #{qhead_forward.1} parent=0 // pred_check
    _
  $region11: #{qhead_forward.1} parent=0 // pred_check_branch
    %14 = sbr.rel (0) target = $region13
  $region12: #{qhead_forward.1} parent=0 // pred_region
    _
  $region13: #{qhead_forward.1} parent=0 // pred_fallthru
    _
  // Predicated region
  $region14: #{qhead_forward.1} parent=0 // pred_check
    _
  $region15: #{qhead_forward.1} parent=0 // pred_check_branch
    %16 = sbr.rel (0) target = $region17
  $region16: #{qhead_forward.1} parent=0 // pred_region
    _
  $region17: #{qhead_forward.1} parent=0 // pred_fallthru
    _
  %v18 = vld [vmem:[%s0] sm:$0xff]
  %v19 = vld [vmem:[%s0 + $0x8] sm:$0xff]
  %v22 = vcombine.high %v18, %v18
  %v24 = vunpack.c.l.s4 1983009808
  %v25 = vunpack.c.0.s8 %v24
  %v26 = vlaneseq
  %v27 = vshrl.u32 %v26, 7
  %v28 = vsub.s32 %v25, %v27
  %v29 = vrot.slane %v18, %v28
  %v31 = vunpack.c.l.s4 1983009808
  %v32 = vunpack.c.0.s8 %v31
  %v33 = vlaneseq
  %v34 = vshrl.u32 %v33, 7
  %v35 = vsub.s32 %v32, %v34
  %v36 = vrot.slane %v22, %v35
  %v37 = vcombine.high %v29, %v29
  %v38 = vcombine.high %v36, %v36
  %v39 = vcombine.high %v19, %v19
  %v41 = vunpack.c.l.s4 1983009808
  %v42 = vunpack.c.0.s8 %v41
  %v43 = vlaneseq
  %v44 = vshrl.u32 %v43, 7
  %v45 = vsub.s32 %v42, %v44
  %v46 = vrot.slane %v19, %v45
  %v48 = vunpack.c.l.s4 1983009808
  %v49 = vunpack.c.0.s8 %v48
  %v50 = vlaneseq
  %v51 = vshrl.u32 %v50, 7
  %v52 = vsub.s32 %v49, %v51
  %v53 = vrot.slane %v39, %v52
  %v54 = vcombine.high %v46, %v46
  %v55 = vcombine.high %v53, %v53
  %v64 = vpack.c.bf16 %v29, %v29
  %v65 = vpack.c.bf16 %v37, %v37
  %v66 = vpack.c.bf16 %v36, %v36
  %v67 = vpack.c.bf16 %v38, %v38
  %v68 = vpack.c.bf16 %v46, %v46
  %v69 = vpack.c.bf16 %v54, %v54
  %v70 = vpack.c.bf16 %v53, %v53
  %v71 = vpack.c.bf16 %v55, %v55
  %v72 = vld [vmem:[%s1] sm:$0xf]
  %v73 = vld [vmem:[%s1 + $0x4] sm:$0xf]
  %v74 = vld [vmem:[%s1 + $0x8] sm:$0xf]
  %v75 = vld [vmem:[%s1 + $0xc] sm:$0xf]
  %v76 = vld [vmem:[%s1 + $0x10] sm:$0xf]
  %v77 = vld [vmem:[%s1 + $0x14] sm:$0xf]
  %v78 = vld [vmem:[%s1 + $0x18] sm:$0xf]
  %v79 = vld [vmem:[%s1 + $0x1c] sm:$0xf]
  %v80 = vld [vmem:[%s1 + $0x20] sm:$0xf]
  %v81 = vld [vmem:[%s1 + $0x24] sm:$0xf]
  %v82 = vld [vmem:[%s1 + $0x28] sm:$0xf]
  %v83 = vld [vmem:[%s1 + $0x2c] sm:$0xf]
  %v84 = vld [vmem:[%s1 + $0x30] sm:$0xf]
  %v85 = vld [vmem:[%s1 + $0x34] sm:$0xf]
  %v86 = vld [vmem:[%s1 + $0x38] sm:$0xf]
  %v87 = vld [vmem:[%s1 + $0x3c] sm:$0xf]
  %v88 = vld [vmem:[%s1 + $0x40] sm:$0xf]
  %v89 = vld [vmem:[%s1 + $0x44] sm:$0xf]
  %v90 = vld [vmem:[%s1 + $0x48] sm:$0xf]
  %v91 = vld [vmem:[%s1 + $0x4c] sm:$0xf]
  %v92 = vld [vmem:[%s1 + $0x50] sm:$0xf]
  %v93 = vld [vmem:[%s1 + $0x54] sm:$0xf]
  %v94 = vld [vmem:[%s1 + $0x58] sm:$0xf]
  %v95 = vld [vmem:[%s1 + $0x5c] sm:$0xf]
  %v96 = vld [vmem:[%s1 + $0x60] sm:$0xf]
  %v97 = vld [vmem:[%s1 + $0x64] sm:$0xf]
  %v98 = vld [vmem:[%s1 + $0x68] sm:$0xf]
  %v99 = vld [vmem:[%s1 + $0x6c] sm:$0xf]
  %v100 = vld [vmem:[%s1 + $0x70] sm:$0xf]
  %v101 = vld [vmem:[%s1 + $0x74] sm:$0xf]
  %v102 = vld [vmem:[%s1 + $0x78] sm:$0xf]
  %v103 = vld [vmem:[%s1 + $0x7c] sm:$0xf]
  %v104 = vld [vmem:[%s1 + $0x80] sm:$0xf]
  %v105 = vld [vmem:[%s1 + $0x84] sm:$0xf]
  %v106 = vld [vmem:[%s1 + $0x88] sm:$0xf]
  %v107 = vld [vmem:[%s1 + $0x8c] sm:$0xf]
  %v108 = vld [vmem:[%s1 + $0x90] sm:$0xf]
  %v109 = vld [vmem:[%s1 + $0x94] sm:$0xf]
  %v110 = vld [vmem:[%s1 + $0x98] sm:$0xf]
  %v111 = vld [vmem:[%s1 + $0x9c] sm:$0xf]
  %v112 = vld [vmem:[%s1 + $0xa0] sm:$0xf]
  %v113 = vld [vmem:[%s1 + $0xa4] sm:$0xf]
  %v114 = vld [vmem:[%s1 + $0xa8] sm:$0xf]
  %v115 = vld [vmem:[%s1 + $0xac] sm:$0xf]
  %v116 = vld [vmem:[%s1 + $0xb0] sm:$0xf]
  %v117 = vld [vmem:[%s1 + $0xb4] sm:$0xf]
  %v118 = vld [vmem:[%s1 + $0xb8] sm:$0xf]
  %v119 = vld [vmem:[%s1 + $0xbc] sm:$0xf]
  %v120 = vld [vmem:[%s1 + $0xc0] sm:$0xf]
  %v121 = vld [vmem:[%s1 + $0xc4] sm:$0xf]
  %v122 = vld [vmem:[%s1 + $0xc8] sm:$0xf]
  %v123 = vld [vmem:[%s1 + $0xcc] sm:$0xf]
  %v124 = vld [vmem:[%s1 + $0xd0] sm:$0xf]
  %v125 = vld [vmem:[%s1 + $0xd4] sm:$0xf]
  %v126 = vld [vmem:[%s1 + $0xd8] sm:$0xf]
  %v127 = vld [vmem:[%s1 + $0xdc] sm:$0xf]
  %v128 = vld [vmem:[%s1 + $0xe0] sm:$0xf]
  %v129 = vld [vmem:[%s1 + $0xe4] sm:$0xf]
  %v130 = vld [vmem:[%s1 + $0xe8] sm:$0xf]
  %v131 = vld [vmem:[%s1 + $0xec] sm:$0xf]
  %v132 = vld [vmem:[%s1 + $0xf0] sm:$0xf]
  %v133 = vld [vmem:[%s1 + $0xf4] sm:$0xf]
  %v134 = vld [vmem:[%s1 + $0xf8] sm:$0xf]
  %v135 = vld [vmem:[%s1 + $0xfc] sm:$0xf]
  %v136 = vld [vmem:[%s1 + $0x100] sm:$0xf]
  %v137 = vld [vmem:[%s1 + $0x104] sm:$0xf]
  %v138 = vld [vmem:[%s1 + $0x108] sm:$0xf]
  %v139 = vld [vmem:[%s1 + $0x10c] sm:$0xf]
  %v140 = vld [vmem:[%s1 + $0x110] sm:$0xf]
  %v141 = vld [vmem:[%s1 + $0x114] sm:$0xf]
  %v142 = vld [vmem:[%s1 + $0x118] sm:$0xf]
  %v143 = vld [vmem:[%s1 + $0x11c] sm:$0xf]
  %v144 = vld [vmem:[%s1 + $0x120] sm:$0xf]
  %v145 = vld [vmem:[%s1 + $0x124] sm:$0xf]
  %v146 = vld [vmem:[%s1 + $0x128] sm:$0xf]
  %v147 = vld [vmem:[%s1 + $0x12c] sm:$0xf]
  %v148 = vld [vmem:[%s1 + $0x130] sm:$0xf]
  %v149 = vld [vmem:[%s1 + $0x134] sm:$0xf]
  %v150 = vld [vmem:[%s1 + $0x138] sm:$0xf]
  %v151 = vld [vmem:[%s1 + $0x13c] sm:$0xf]
  %v152 = vld [vmem:[%s1 + $0x140] sm:$0xf]
  %v153 = vld [vmem:[%s1 + $0x144] sm:$0xf]
  %v154 = vld [vmem:[%s1 + $0x148] sm:$0xf]
  %v155 = vld [vmem:[%s1 + $0x14c] sm:$0xf]
  %v156 = vld [vmem:[%s1 + $0x150] sm:$0xf]
  %v157 = vld [vmem:[%s1 + $0x154] sm:$0xf]
  %v158 = vld [vmem:[%s1 + $0x158] sm:$0xf]
  %v159 = vld [vmem:[%s1 + $0x15c] sm:$0xf]
  %v160 = vld [vmem:[%s1 + $0x160] sm:$0xf]
  %v161 = vld [vmem:[%s1 + $0x164] sm:$0xf]
  %v162 = vld [vmem:[%s1 + $0x168] sm:$0xf]
  %v163 = vld [vmem:[%s1 + $0x16c] sm:$0xf]
  %v164 = vld [vmem:[%s1 + $0x170] sm:$0xf]
  %v165 = vld [vmem:[%s1 + $0x174] sm:$0xf]
  %v166 = vld [vmem:[%s1 + $0x178] sm:$0xf]
  %v167 = vld [vmem:[%s1 + $0x17c] sm:$0xf]
  %v168 = vld [vmem:[%s1 + $0x180] sm:$0xf]
  %v169 = vld [vmem:[%s1 + $0x184] sm:$0xf]
  %v170 = vld [vmem:[%s1 + $0x188] sm:$0xf]
  %v171 = vld [vmem:[%s1 + $0x18c] sm:$0xf]
  %v172 = vld [vmem:[%s1 + $0x190] sm:$0xf]
  %v173 = vld [vmem:[%s1 + $0x194] sm:$0xf]
  %v174 = vld [vmem:[%s1 + $0x198] sm:$0xf]
  %v175 = vld [vmem:[%s1 + $0x19c] sm:$0xf]
  %v176 = vld [vmem:[%s1 + $0x1a0] sm:$0xf]
  %v177 = vld [vmem:[%s1 + $0x1a4] sm:$0xf]
  %v178 = vld [vmem:[%s1 + $0x1a8] sm:$0xf]
  %v179 = vld [vmem:[%s1 + $0x1ac] sm:$0xf]
  %v180 = vld [vmem:[%s1 + $0x1b0] sm:$0xf]
  %v181 = vld [vmem:[%s1 + $0x1b4] sm:$0xf]
  %v182 = vld [vmem:[%s1 + $0x1b8] sm:$0xf]
  %v183 = vld [vmem:[%s1 + $0x1bc] sm:$0xf]
  %v184 = vld [vmem:[%s1 + $0x1c0] sm:$0xf]
  %v185 = vld [vmem:[%s1 + $0x1c4] sm:$0xf]
  %v186 = vld [vmem:[%s1 + $0x1c8] sm:$0xf]
  %v187 = vld [vmem:[%s1 + $0x1cc] sm:$0xf]
  %v188 = vld [vmem:[%s1 + $0x1d0] sm:$0xf]
  %v189 = vld [vmem:[%s1 + $0x1d4] sm:$0xf]
  %v190 = vld [vmem:[%s1 + $0x1d8] sm:$0xf]
  %v191 = vld [vmem:[%s1 + $0x1dc] sm:$0xf]
  %v192 = vld [vmem:[%s1 + $0x1e0] sm:$0xf]
  %v193 = vld [vmem:[%s1 + $0x1e4] sm:$0xf]
  %v194 = vld [vmem:[%s1 + $0x1e8] sm:$0xf]
  %v195 = vld [vmem:[%s1 + $0x1ec] sm:$0xf]
  %v196 = vld [vmem:[%s1 + $0x1f0] sm:$0xf]
  %v197 = vld [vmem:[%s1 + $0x1f4] sm:$0xf]
  %v198 = vld [vmem:[%s1 + $0x1f8] sm:$0xf]
  %v199 = vld [vmem:[%s1 + $0x1fc] sm:$0xf]
  %v328 = vunpack.c.l.b16 %v72
  %v329 = vunpack.c.l.b16 %v73
  %v330 = vunpack.c.l.b16 %v74
  %v331 = vunpack.c.l.b16 %v75
  %v332 = vunpack.c.l.b16 %v76
  %v333 = vunpack.c.l.b16 %v77
  %v334 = vunpack.c.l.b16 %v78
  %v335 = vunpack.c.l.b16 %v79
  %v336 = vunpack.c.l.b16 %v80
  %v337 = vunpack.c.l.b16 %v81
  %v338 = vunpack.c.l.b16 %v82
  %v339 = vunpack.c.l.b16 %v83
  %v340 = vunpack.c.l.b16 %v84
  %v341 = vunpack.c.l.b16 %v85
  %v342 = vunpack.c.l.b16 %v86
  %v343 = vunpack.c.l.b16 %v87
  %v344 = vunpack.c.l.b16 %v88
  %v345 = vunpack.c.l.b16 %v89
  %v346 = vunpack.c.l.b16 %v90
  %v347 = vunpack.c.l.b16 %v91
  %v348 = vunpack.c.l.b16 %v92
  %v349 = vunpack.c.l.b16 %v93
  %v350 = vunpack.c.l.b16 %v94
  %v351 = vunpack.c.l.b16 %v95
  %v352 = vunpack.c.l.b16 %v96
  %v353 = vunpack.c.l.b16 %v97
  %v354 = vunpack.c.l.b16 %v98
  %v355 = vunpack.c.l.b16 %v99
  %v356 = vunpack.c.l.b16 %v100
  %v357 = vunpack.c.l.b16 %v101
  %v358 = vunpack.c.l.b16 %v102
  %v359 = vunpack.c.l.b16 %v103
  %v360 = vunpack.c.l.b16 %v104
  %v361 = vunpack.c.l.b16 %v105
  %v362 = vunpack.c.l.b16 %v106
  %v363 = vunpack.c.l.b16 %v107
  %v364 = vunpack.c.l.b16 %v108
  %v365 = vunpack.c.l.b16 %v109
  %v366 = vunpack.c.l.b16 %v110
  %v367 = vunpack.c.l.b16 %v111
  %v368 = vunpack.c.l.b16 %v112
  %v369 = vunpack.c.l.b16 %v113
  %v370 = vunpack.c.l.b16 %v114
  %v371 = vunpack.c.l.b16 %v115
  %v372 = vunpack.c.l.b16 %v116
  %v373 = vunpack.c.l.b16 %v117
  %v374 = vunpack.c.l.b16 %v118
  %v375 = vunpack.c.l.b16 %v119
  %v376 = vunpack.c.l.b16 %v120
  %v377 = vunpack.c.l.b16 %v121
  %v378 = vunpack.c.l.b16 %v122
  %v379 = vunpack.c.l.b16 %v123
  %v380 = vunpack.c.l.b16 %v124
  %v381 = vunpack.c.l.b16 %v125
  %v382 = vunpack.c.l.b16 %v126
  %v383 = vunpack.c.l.b16 %v127
  %v384 = vunpack.c.l.b16 %v128
  %v385 = vunpack.c.l.b16 %v129
  %v386 = vunpack.c.l.b16 %v130
  %v387 = vunpack.c.l.b16 %v131
  %v388 = vunpack.c.l.b16 %v132
  %v389 = vunpack.c.l.b16 %v133
  %v390 = vunpack.c.l.b16 %v134
  %v391 = vunpack.c.l.b16 %v135
  %v392 = vunpack.c.l.b16 %v136
  %v393 = vunpack.c.l.b16 %v137
  %v394 = vunpack.c.l.b16 %v138
  %v395 = vunpack.c.l.b16 %v139
  %v396 = vunpack.c.l.b16 %v140
  %v397 = vunpack.c.l.b16 %v141
  %v398 = vunpack.c.l.b16 %v142
  %v399 = vunpack.c.l.b16 %v143
  %v400 = vunpack.c.l.b16 %v144
  %v401 = vunpack.c.l.b16 %v145
  %v402 = vunpack.c.l.b16 %v146
  %v403 = vunpack.c.l.b16 %v147
  %v404 = vunpack.c.l.b16 %v148
  %v405 = vunpack.c.l.b16 %v149
  %v406 = vunpack.c.l.b16 %v150
  %v407 = vunpack.c.l.b16 %v151
  %v408 = vunpack.c.l.b16 %v152
  %v409 = vunpack.c.l.b16 %v153
  %v410 = vunpack.c.l.b16 %v154
  %v411 = vunpack.c.l.b16 %v155
  %v412 = vunpack.c.l.b16 %v156
  %v413 = vunpack.c.l.b16 %v157
  %v414 = vunpack.c.l.b16 %v158
  %v415 = vunpack.c.l.b16 %v159
  %v416 = vunpack.c.l.b16 %v160
  %v417 = vunpack.c.l.b16 %v161
  %v418 = vunpack.c.l.b16 %v162
  %v419 = vunpack.c.l.b16 %v163
  %v420 = vunpack.c.l.b16 %v164
  %v421 = vunpack.c.l.b16 %v165
  %v422 = vunpack.c.l.b16 %v166
  %v423 = vunpack.c.l.b16 %v167
  %v424 = vunpack.c.l.b16 %v168
  %v425 = vunpack.c.l.b16 %v169
  %v426 = vunpack.c.l.b16 %v170
  %v427 = vunpack.c.l.b16 %v171
  %v428 = vunpack.c.l.b16 %v172
  %v429 = vunpack.c.l.b16 %v173
  %v430 = vunpack.c.l.b16 %v174
  %v431 = vunpack.c.l.b16 %v175
  %v432 = vunpack.c.l.b16 %v176
  %v433 = vunpack.c.l.b16 %v177
  %v434 = vunpack.c.l.b16 %v178
  %v435 = vunpack.c.l.b16 %v179
  %v436 = vunpack.c.l.b16 %v180
  %v437 = vunpack.c.l.b16 %v181
  %v438 = vunpack.c.l.b16 %v182
  %v439 = vunpack.c.l.b16 %v183
  %v440 = vunpack.c.l.b16 %v184
  %v441 = vunpack.c.l.b16 %v185
  %v442 = vunpack.c.l.b16 %v186
  %v443 = vunpack.c.l.b16 %v187
  %v444 = vunpack.c.l.b16 %v188
  %v445 = vunpack.c.l.b16 %v189
  %v446 = vunpack.c.l.b16 %v190
  %v447 = vunpack.c.l.b16 %v191
  %v448 = vunpack.c.l.b16 %v192
  %v449 = vunpack.c.l.b16 %v193
  %v450 = vunpack.c.l.b16 %v194
  %v451 = vunpack.c.l.b16 %v195
  %v452 = vunpack.c.l.b16 %v196
  %v453 = vunpack.c.l.b16 %v197
  %v454 = vunpack.c.l.b16 %v198
  %v455 = vunpack.c.l.b16 %v199
  %v456 = vpack.c.b16 %v329, %v328
  %v457 = vpack.c.b16 %v331, %v330
  %v458 = vpack.c.b16 %v333, %v332
  %v459 = vpack.c.b16 %v335, %v334
  %v460 = vpack.c.b16 %v337, %v336
  %v461 = vpack.c.b16 %v339, %v338
  %v462 = vpack.c.b16 %v341, %v340
  %v463 = vpack.c.b16 %v343, %v342
  %v464 = vpack.c.b16 %v345, %v344
  %v465 = vpack.c.b16 %v347, %v346
  %v466 = vpack.c.b16 %v349, %v348
  %v467 = vpack.c.b16 %v351, %v350
  %v468 = vpack.c.b16 %v353, %v352
  %v469 = vpack.c.b16 %v355, %v354
  %v470 = vpack.c.b16 %v357, %v356
  %v471 = vpack.c.b16 %v359, %v358
  %v472 = vpack.c.b16 %v361, %v360
  %v473 = vpack.c.b16 %v363, %v362
  %v474 = vpack.c.b16 %v365, %v364
  %v475 = vpack.c.b16 %v367, %v366
  %v476 = vpack.c.b16 %v369, %v368
  %v477 = vpack.c.b16 %v371, %v370
  %v478 = vpack.c.b16 %v373, %v372
  %v479 = vpack.c.b16 %v375, %v374
  %v480 = vpack.c.b16 %v377, %v376
  %v481 = vpack.c.b16 %v379, %v378
  %v482 = vpack.c.b16 %v381, %v380
  %v483 = vpack.c.b16 %v383, %v382
  %v484 = vpack.c.b16 %v385, %v384
  %v485 = vpack.c.b16 %v387, %v386
  %v486 = vpack.c.b16 %v389, %v388
  %v487 = vpack.c.b16 %v391, %v390
  %v488 = vpack.c.b16 %v393, %v392
  %v489 = vpack.c.b16 %v395, %v394
  %v490 = vpack.c.b16 %v397, %v396
  %v491 = vpack.c.b16 %v399, %v398
  %v492 = vpack.c.b16 %v401, %v400
  %v493 = vpack.c.b16 %v403, %v402
  %v494 = vpack.c.b16 %v405, %v404
  %v495 = vpack.c.b16 %v407, %v406
  %v496 = vpack.c.b16 %v409, %v408
  %v497 = vpack.c.b16 %v411, %v410
  %v498 = vpack.c.b16 %v413, %v412
  %v499 = vpack.c.b16 %v415, %v414
  %v500 = vpack.c.b16 %v417, %v416
  %v501 = vpack.c.b16 %v419, %v418
  %v502 = vpack.c.b16 %v421, %v420
  %v503 = vpack.c.b16 %v423, %v422
  %v504 = vpack.c.b16 %v425, %v424
  %v505 = vpack.c.b16 %v427, %v426
  %v506 = vpack.c.b16 %v429, %v428
  %v507 = vpack.c.b16 %v431, %v430
  %v508 = vpack.c.b16 %v433, %v432
  %v509 = vpack.c.b16 %v435, %v434
  %v510 = vpack.c.b16 %v437, %v436
  %v511 = vpack.c.b16 %v439, %v438
  %v512 = vpack.c.b16 %v441, %v440
  %v513 = vpack.c.b16 %v443, %v442
  %v514 = vpack.c.b16 %v445, %v444
  %v515 = vpack.c.b16 %v447, %v446
  %v516 = vpack.c.b16 %v449, %v448
  %v517 = vpack.c.b16 %v451, %v450
  %v518 = vpack.c.b16 %v453, %v452
  %v519 = vpack.c.b16 %v455, %v454
  %584 = vmatprep.subr.bf16.mxu0 0
  %585 = vmatpush1.bf16.msra.mxu0 %v463
  %586 = vmatprep.subr.bf16.mxu0 0
  %587 = vmatpush1.bf16.msra.mxu0 %v462
  %588 = vmatprep.subr.bf16.mxu0 0
  %589 = vmatpush1.bf16.msra.mxu0 %v461
  %590 = vmatprep.subr.bf16.mxu0 0
  %591 = vmatpush1.bf16.msra.mxu0 %v460
  %592 = vmatprep.subr.bf16.mxu0 0
  %593 = vmatpush1.bf16.msra.mxu0 %v459
  %594 = vmatprep.subr.bf16.mxu0 0
  %595 = vmatpush1.bf16.msra.mxu0 %v458
  %596 = vmatprep.subr.bf16.mxu0 0
  %597 = vmatpush1.bf16.msra.mxu0 %v457
  %598 = vmatprep.subr.bf16.mxu0 0
  %599 = vmatpush1.bf16.msra.mxu0 %v456
  %600 = vmatprep.subr.bf16.mxu0 0
  %601 = vmatpush2.bf16.msra.mxu0 %v471
  %602 = vmatprep.subr.bf16.mxu0 0
  %603 = vmatpush2.bf16.msra.mxu0 %v470
  %604 = vmatprep.subr.bf16.mxu0 0
  %605 = vmatpush2.bf16.msra.mxu0 %v469
  %606 = vmatprep.subr.bf16.mxu0 0
  %607 = vmatpush2.bf16.msra.mxu0 %v468
  %608 = vmatprep.subr.bf16.mxu0 0
  %609 = vmatpush2.bf16.msra.mxu0 %v467
  %610 = vmatprep.subr.bf16.mxu0 0
  %611 = vmatpush2.bf16.msra.mxu0 %v466
  %612 = vmatprep.subr.bf16.mxu0 0
  %613 = vmatpush2.bf16.msra.mxu0 %v465
  %614 = vmatprep.subr.bf16.mxu0 0
  %615 = vmatpush2.bf16.msra.mxu0 %v464
  %616 = vmatprep.mubr.bf16.mxu0 %v65
  %617 = vmatmul.mubr.bf16.gmra.mxu0 %v64
  %v618 = vpop.f32.mrf.mxu0
  %v619 = vadd.f32 0.0, %v618
  %v620 = vpop.f32.mrf.mxu0
  %v621 = vpop.f32.mrf.mxu0
  %v622 = vpop.f32.mrf.mxu0
  %623 = vdwg.mxu0
  %624 = vmatprep.subr.bf16.mxu0 0
  %625 = vmatpush1.bf16.msra.mxu0 %v479
  %626 = vmatprep.subr.bf16.mxu0 0
  %627 = vmatpush1.bf16.msra.mxu0 %v478
  %628 = vmatprep.subr.bf16.mxu0 0
  %629 = vmatpush1.bf16.msra.mxu0 %v477
  %630 = vmatprep.subr.bf16.mxu0 0
  %631 = vmatpush1.bf16.msra.mxu0 %v476
  %632 = vmatprep.subr.bf16.mxu0 0
  %633 = vmatpush1.bf16.msra.mxu0 %v475
  %634 = vmatprep.subr.bf16.mxu0 0
  %635 = vmatpush1.bf16.msra.mxu0 %v474
  %636 = vmatprep.subr.bf16.mxu0 0
  %637 = vmatpush1.bf16.msra.mxu0 %v473
  %638 = vmatprep.subr.bf16.mxu0 0
  %639 = vmatpush1.bf16.msra.mxu0 %v472
  %640 = vmatprep.subr.bf16.mxu0 0
  %641 = vmatpush2.bf16.msra.mxu0 %v487
  %642 = vmatprep.subr.bf16.mxu0 0
  %643 = vmatpush2.bf16.msra.mxu0 %v486
  %644 = vmatprep.subr.bf16.mxu0 0
  %645 = vmatpush2.bf16.msra.mxu0 %v485
  %646 = vmatprep.subr.bf16.mxu0 0
  %647 = vmatpush2.bf16.msra.mxu0 %v484
  %648 = vmatprep.subr.bf16.mxu0 0
  %649 = vmatpush2.bf16.msra.mxu0 %v483
  %650 = vmatprep.subr.bf16.mxu0 0
  %651 = vmatpush2.bf16.msra.mxu0 %v482
  %652 = vmatprep.subr.bf16.mxu0 0
  %653 = vmatpush2.bf16.msra.mxu0 %v481
  %654 = vmatprep.subr.bf16.mxu0 0
  %655 = vmatpush2.bf16.msra.mxu0 %v480
  %656 = vmatprep.mubr.bf16.mxu0 %v67
  %657 = vmatmul.mubr.bf16.gmra.mxu0 %v66
  %v658 = vpop.f32.mrf.mxu0
  %v659 = vadd.f32 %v619, %v658
  %v660 = vpop.f32.mrf.mxu0
  %v661 = vpop.f32.mrf.mxu0
  %v662 = vpop.f32.mrf.mxu0
  %663 = vdwg.mxu0
  %664 = vmatprep.subr.bf16.mxu0 0
  %665 = vmatpush1.bf16.msra.mxu0 %v495
  %666 = vmatprep.subr.bf16.mxu0 0
  %667 = vmatpush1.bf16.msra.mxu0 %v494
  %668 = vmatprep.subr.bf16.mxu0 0
  %669 = vmatpush1.bf16.msra.mxu0 %v493
  %670 = vmatprep.subr.bf16.mxu0 0
  %671 = vmatpush1.bf16.msra.mxu0 %v492
  %672 = vmatprep.subr.bf16.mxu0 0
  %673 = vmatpush1.bf16.msra.mxu0 %v491
  %674 = vmatprep.subr.bf16.mxu0 0
  %675 = vmatpush1.bf16.msra.mxu0 %v490
  %676 = vmatprep.subr.bf16.mxu0 0
  %677 = vmatpush1.bf16.msra.mxu0 %v489
  %678 = vmatprep.subr.bf16.mxu0 0
  %679 = vmatpush1.bf16.msra.mxu0 %v488
  %680 = vmatprep.subr.bf16.mxu0 0
  %681 = vmatpush2.bf16.msra.mxu0 %v503
  %682 = vmatprep.subr.bf16.mxu0 0
  %683 = vmatpush2.bf16.msra.mxu0 %v502
  %684 = vmatprep.subr.bf16.mxu0 0
  %685 = vmatpush2.bf16.msra.mxu0 %v501
  %686 = vmatprep.subr.bf16.mxu0 0
  %687 = vmatpush2.bf16.msra.mxu0 %v500
  %688 = vmatprep.subr.bf16.mxu0 0
  %689 = vmatpush2.bf16.msra.mxu0 %v499
  %690 = vmatprep.subr.bf16.mxu0 0
  %691 = vmatpush2.bf16.msra.mxu0 %v498
  %692 = vmatprep.subr.bf16.mxu0 0
  %693 = vmatpush2.bf16.msra.mxu0 %v497
  %694 = vmatprep.subr.bf16.mxu0 0
  %695 = vmatpush2.bf16.msra.mxu0 %v496
  %696 = vmatprep.mubr.bf16.mxu0 %v69
  %697 = vmatmul.mubr.bf16.gmra.mxu0 %v68
  %v698 = vpop.f32.mrf.mxu0
  %v699 = vadd.f32 %v659, %v698
  %v700 = vpop.f32.mrf.mxu0
  %v701 = vpop.f32.mrf.mxu0
  %v702 = vpop.f32.mrf.mxu0
  %703 = vdwg.mxu0
  %704 = vmatprep.subr.bf16.mxu0 0
  %705 = vmatpush1.bf16.msra.mxu0 %v511
  %706 = vmatprep.subr.bf16.mxu0 0
  %707 = vmatpush1.bf16.msra.mxu0 %v510
  %708 = vmatprep.subr.bf16.mxu0 0
  %709 = vmatpush1.bf16.msra.mxu0 %v509
  %710 = vmatprep.subr.bf16.mxu0 0
  %711 = vmatpush1.bf16.msra.mxu0 %v508
  %712 = vmatprep.subr.bf16.mxu0 0
  %713 = vmatpush1.bf16.msra.mxu0 %v507
  %714 = vmatprep.subr.bf16.mxu0 0
  %715 = vmatpush1.bf16.msra.mxu0 %v506
  %716 = vmatprep.subr.bf16.mxu0 0
  %717 = vmatpush1.bf16.msra.mxu0 %v505
  %718 = vmatprep.subr.bf16.mxu0 0
  %719 = vmatpush1.bf16.msra.mxu0 %v504
  %720 = vmatprep.subr.bf16.mxu0 0
  %721 = vmatpush2.bf16.msra.mxu0 %v519
  %722 = vmatprep.subr.bf16.mxu0 0
  %723 = vmatpush2.bf16.msra.mxu0 %v518
  %724 = vmatprep.subr.bf16.mxu0 0
  %725 = vmatpush2.bf16.msra.mxu0 %v517
  %726 = vmatprep.subr.bf16.mxu0 0
  %727 = vmatpush2.bf16.msra.mxu0 %v516
  %728 = vmatprep.subr.bf16.mxu0 0
  %729 = vmatpush2.bf16.msra.mxu0 %v515
  %730 = vmatprep.subr.bf16.mxu0 0
  %731 = vmatpush2.bf16.msra.mxu0 %v514
  %732 = vmatprep.subr.bf16.mxu0 0
  %733 = vmatpush2.bf16.msra.mxu0 %v513
  %734 = vmatprep.subr.bf16.mxu0 0
  %735 = vmatpush2.bf16.msra.mxu0 %v512
  %736 = vmatprep.mubr.bf16.mxu0 %v71
  %737 = vmatmul.mubr.bf16.gmra.mxu0 %v70
  %v738 = vpop.f32.mrf.mxu0
  %v739 = vadd.f32 %v699, %v738
  %v740 = vpop.f32.mrf.mxu0
  %v741 = vpop.f32.mrf.mxu0
  %v742 = vpop.f32.mrf.mxu0
  %743 = vdwg.mxu0
  %vm744 = vcmask 1041408
  %v745 = vsel %vm744, %v739, 0.0
  %v746 = vrot.slane %v745, 4
  %v747 = vadd.f32 %v745, %v746
  %v748 = vrot.slane %v747, 2
  %v749 = vadd.f32 %v747, %v748
  %v750 = vrot.slane %v749, 1
  %v751 = vadd.f32 %v749, %v750
  %v752 = vrcp.pop 2.0
  %v753 = vmul.f32 %v751, %v752
  %v754 = vsub.f32 %v739, %v753
  %v755 = vmul.f32 %v754, %v754
  %v756 = vsel %vm744, %v755, 0.0
  %v757 = vrot.slane %v756, 4
  %v758 = vadd.f32 %v756, %v757
  %v759 = vrot.slane %v758, 2
  %v760 = vadd.f32 %v758, %v759
  %v761 = vrot.slane %v760, 1
  %v762 = vadd.f32 %v760, %v761
  %v763 = vmul.f32 %v762, %v752
  %v764 = vadd.f32 %v763, 1e-05
  %v765 = vrsqrt.pop %v764
  %v766 = vmul.f32 %v754, %v765
  %v767 = vld [vmem:[%s3] sm:$0x1]
  %v768 = vlaneseq
  %v769 = vshrl.u32 %v768, 7
  %v770 = vsub.s32 0, %v769
  %v771 = vrot.slane %v767, %v770
  %v772 = vmul.f32 %v766, %v771
  %v773 = vld [vmem:[%s3 + $0x1] sm:$0x1]
  %v774 = vlaneseq
  %v775 = vshrl.u32 %v774, 7
  %v776 = vsub.s32 0, %v775
  %v777 = vrot.slane %v773, %v776
  %v778 = vadd.f32 %v772, %v777
  %v779 = vmul.f32 %v778, 0.1
  %v780 = vmax.f32 %v778, %v779
  %v781 = vpack.c.bf16 %v780, %v780
  %v782 = vld [vmem:[%s2] sm:$0xf]
  %v783 = vld [vmem:[%s2 + $0x4] sm:$0xf]
  %v784 = vld [vmem:[%s2 + $0x8] sm:$0xf]
  %v785 = vld [vmem:[%s2 + $0xc] sm:$0xf]
  %v786 = vld [vmem:[%s2 + $0x10] sm:$0xf]
  %v787 = vld [vmem:[%s2 + $0x14] sm:$0xf]
  %v788 = vld [vmem:[%s2 + $0x18] sm:$0xf]
  %v789 = vld [vmem:[%s2 + $0x1c] sm:$0xf]
  %v790 = vld [vmem:[%s2 + $0x20] sm:$0xf]
  %v791 = vld [vmem:[%s2 + $0x24] sm:$0xf]
  %v792 = vld [vmem:[%s2 + $0x28] sm:$0xf]
  %v793 = vld [vmem:[%s2 + $0x2c] sm:$0xf]
  %v794 = vld [vmem:[%s2 + $0x30] sm:$0xf]
  %v795 = vld [vmem:[%s2 + $0x34] sm:$0xf]
  %v796 = vld [vmem:[%s2 + $0x38] sm:$0xf]
  %v797 = vld [vmem:[%s2 + $0x3c] sm:$0xf]
  %v798 = vld [vmem:[%s3 + $0x2] sm:$0x1]
  %v799 = vlaneseq
  %v800 = vshrl.u32 %v799, 7
  %v801 = vsub.s32 0, %v800
  %v802 = vrot.slane %v798, %v801
  %v819 = vunpack.c.l.b16 %v782
  %v820 = vunpack.c.l.b16 %v783
  %v821 = vunpack.c.l.b16 %v784
  %v822 = vunpack.c.l.b16 %v785
  %v823 = vunpack.c.l.b16 %v786
  %v824 = vunpack.c.l.b16 %v787
  %v825 = vunpack.c.l.b16 %v788
  %v826 = vunpack.c.l.b16 %v789
  %v827 = vunpack.c.l.b16 %v790
  %v828 = vunpack.c.l.b16 %v791
  %v829 = vunpack.c.l.b16 %v792
  %v830 = vunpack.c.l.b16 %v793
  %v831 = vunpack.c.l.b16 %v794
  %v832 = vunpack.c.l.b16 %v795
  %v833 = vunpack.c.l.b16 %v796
  %v834 = vunpack.c.l.b16 %v797
  %v835 = vpack.c.b16 %v820, %v819
  %v836 = vpack.c.b16 %v822, %v821
  %v837 = vpack.c.b16 %v824, %v823
  %v838 = vpack.c.b16 %v826, %v825
  %v839 = vpack.c.b16 %v828, %v827
  %v840 = vpack.c.b16 %v830, %v829
  %v841 = vpack.c.b16 %v832, %v831
  %v842 = vpack.c.b16 %v834, %v833
  %851 = vmatprep.subr.bf16.mxu0 0
  %852 = vmatpush1.bf16.msra.mxu0 %v842
  %853 = vmatprep.subr.bf16.mxu0 0
  %854 = vmatpush1.bf16.msra.mxu0 %v841
  %855 = vmatprep.subr.bf16.mxu0 0
  %856 = vmatpush1.bf16.msra.mxu0 %v840
  %857 = vmatprep.subr.bf16.mxu0 0
  %858 = vmatpush1.bf16.msra.mxu0 %v839
  %859 = vmatprep.subr.bf16.mxu0 0
  %860 = vmatpush1.bf16.msra.mxu0 %v838
  %861 = vmatprep.subr.bf16.mxu0 0
  %862 = vmatpush1.bf16.msra.mxu0 %v837
  %863 = vmatprep.subr.bf16.mxu0 0
  %864 = vmatpush1.bf16.msra.mxu0 %v836
  %865 = vmatprep.subr.bf16.mxu0 0
  %866 = vmatpush1.bf16.msra.mxu0 %v835
  %867 = vmatprep.subr.bf16.mxu0 0
  %868 = vmatpush2.bf16.msra.mxu0 0
  %869 = vmatprep.subr.bf16.mxu0 0
  %870 = vmatpush2.bf16.msra.mxu0 0
  %871 = vmatprep.subr.bf16.mxu0 0
  %872 = vmatpush2.bf16.msra.mxu0 0
  %873 = vmatprep.subr.bf16.mxu0 0
  %874 = vmatpush2.bf16.msra.mxu0 0
  %875 = vmatprep.subr.bf16.mxu0 0
  %876 = vmatpush2.bf16.msra.mxu0 0
  %877 = vmatprep.subr.bf16.mxu0 0
  %878 = vmatpush2.bf16.msra.mxu0 0
  %879 = vmatprep.subr.bf16.mxu0 0
  %880 = vmatpush2.bf16.msra.mxu0 0
  %881 = vmatprep.subr.bf16.mxu0 0
  %882 = vmatpush2.bf16.msra.mxu0 0
  %883 = vmatprep.mubr.bf16.mxu0 0
  %884 = vmatmul.mubr.bf16.gmra.mxu0 %v781
  %v885 = vpop.f32.mrf.mxu0
  %v886 = vadd.f32 %v802, %v885
  %v887 = vpop.f32.mrf.mxu0
  %v888 = vpop.f32.mrf.mxu0
  %v889 = vpop.f32.mrf.mxu0
  %890 = vdwg.mxu0
  %v891 = vld [vmem:[%s3 + $0x3] sm:$0x1]
  %v892 = vlaneseq
  %v893 = vshrl.u32 %v892, 7
  %v894 = vsub.s32 0, %v893
  %v895 = vrot.slane %v891, %v894
  %v896 = vmul.f32 %v886, %v895
  %v897 = vmul.f32 %v896, 1.442695
  %v898 = vpow.pop %v897
  %vm899 = vcmp.gt.f32.partialorder %v891, 0.0
  %v900 = vsel %vm899, 1, 0
  %v901 = vlaneseq
  %v902 = vshrl.u32 %v901, 7
  %v903 = vsub.s32 0, %v902
  %v904 = vrot.slane %v900, %v903
  %vm905 = vcmp.eq.s32.totalorder %v904, 1
  %v906 = vsel %vm905, %v898, %v886
  %907 = vst [vmem:[%s4] sm:$0x3] %v906
  // Predicated region
  $region18: #{qhead_forward.1} parent=0 // pred_check
    _
  $region19: #{qhead_forward.1} parent=0 // pred_check_branch
    %909 = sbr.rel (0) target = $region21
  $region20: #{qhead_forward.1} parent=0 // pred_region
    _
  $region21: #{qhead_forward.1} parent=0 // pred_fallthru
    _
  // Predicated region
  $region22: #{qhead_forward.1} parent=0 // pred_check
    _
  $region23: #{qhead_forward.1} parent=0 // pred_check_branch
    %911 = sbr.rel (0) target = $region25
  $region24: #{qhead_forward.1} parent=0 // pred_region
    _
  $region25: #{qhead_forward.1} parent=0 // pred_fallthru
    _

</llo_original>
